<compile_context>
chip_gen: v6e
topology: v6e:2x2x1
jax: 0.10.0
libtpu: 0.0.40
codegen_flags: <defaults>
</compile_context>

<pallas_src>
import numpy as np
import jax
import jax.numpy as jnp
from jax.experimental import pallas as pl
from jax.experimental.pallas import tpu as pltpu


def _round_up(x, m):
    return ((x + m - 1) // m) * m


def _dbuf_block_bytes(th, w):
    """Padded, double-buffered VMEM bytes for one (1, 1, th, w) uint8 input tile
    plus one (1, 1, th, w) float32 output tile.  uint8 tiles pad sublanes to 32,
    float32 tiles to 8; both pad lanes to 128."""
    in_b = _round_up(th, 32) * _round_up(w, 128) * 1
    out_b = _round_up(th, 8) * _round_up(w, 128) * 4
    return 2 * (in_b + out_b)


def _vmem_budget_and_limit():
    """Generation-aware (block_budget_bytes, vmem_limit_bytes).

    Block budget = 1/4 of physical VMEM (double-buffered in+out working set),
    explicit scoped limit = 1/2 of physical.  v5e/v6e (128 MiB) -> 32/64 MiB,
    v7x (64 MiB per TC) -> 16/32 MiB, matching the review guidance."""
    try:
        phys = pltpu.get_tpu_info().vmem_capacity_bytes
    except Exception:
        phys = 64 * 1024 * 1024          # conservative: v7x per-TC VMEM
    return phys // 4, phys // 2


def _pick_row_tile(h, w, c, budget_bytes, min_steps_per_image=8):
    """Largest multiple-of-8 row tile whose padded double-buffered blocks fit
    `budget_bytes`, capped so each image still yields >= min_steps_per_image
    grid steps (C * cdiv(H, th)) to keep v7x's two TensorCores and the DMA
    pipeline busy."""
    h8 = _round_up(max(h, 1), 8)
    best = 8
    th = 8
    while th <= h8 and _dbuf_block_bytes(th, w) <= budget_bytes:
        best = th
        th += 8
    want_row_steps = max(1, -(-min_steps_per_image // max(c, 1)))
    cap = _round_up(max(8, -(-h // want_row_steps)), 8)
    return max(8, min(best, cap))


def _make_cast_kernel(out_dtype):
    def kernel(img_ref, out_ref):
        # img_ref / out_ref: (1, 1, TH, W) blocks.  The whole body is one
        # full-block uint8 -> float cast; the RGB->BGR flip already happened in
        # the input BlockSpec index_map (pure addressing, zero data movement).
        out_ref[...] = img_ref[...].astype(out_dtype)
    return kernel


def batch_preprocess(imgs_chw_u8, input_format="RGB", out_dtype=jnp.float32):
    """imgs_chw_u8: (B, C, H, W) uint8, channel-planar, original channel order.
    Returns (B, C, H, W) `out_dtype`; the channel axis is reversed when
    input_format == 'RGB' (detectron2 models consume BGR).

    `out_dtype=jnp.bfloat16` halves the write traffic (~40% less total HBM
    traffic) if the downstream model's first layer accepts bf16; the default
    stays float32 to match the reference numerics exactly."""
    assert imgs_chw_u8.dtype == jnp.uint8, imgs_chw_u8.dtype
    B, C, H, W = imgs_chw_u8.shape
    flip = (input_format == "RGB")

    budget, vmem_limit = _vmem_budget_and_limit()
    th = _pick_row_tile(H, W, C, budget)
    n_rows = pl.cdiv(H, th)              # ragged last block is fine

    if flip:
        in_map = lambda b, c, t: (b, C - 1 - c, t, 0)   # flip by addressing
    else:
        in_map = lambda b, c, t: (b, c, t, 0)
    out_map = lambda b, c, t: (b, c, t, 0)

    return pl.pallas_call(
        _make_cast_kernel(out_dtype),
        out_shape=jax.ShapeDtypeStruct((B, C, H, W), out_dtype),
        grid=(B, C, n_rows),
        in_specs=[pl.BlockSpec((1, 1, th, W), in_map)],
        out_specs=pl.BlockSpec((1, 1, th, W), out_map),
        compiler_params=pltpu.CompilerParams(
            dimension_semantics=("parallel", "parallel", "parallel"),
            vmem_limit_bytes=vmem_limit),
    )(imgs_chw_u8)


class BatchPredictorPallas:
    """JAX/Pallas analogue of the batch version of detectron2 DefaultPredictor."""

    def __init__(self, min_size_test=16, max_size_test=16, input_format="RGB"):
        assert input_format in ("RGB", "BGR"), input_format
        self.input_format = input_format
        self.min_size_test = min_size_test
        self.max_size_test = max_size_test
        # TODO(synk): build_model(cfg) / DetectionCheckpointer load an external
        # detectron2 GeneralizedRCNN that is not defined by this module; it is
        # not translatable from the given source alone.

    def __call__(self, imgs):
        # imgs: list of HWC uint8 images, already at MIN_SIZE_TEST so the
        # ResizeShortestEdge transform reduces to identity.
        heights = [int(im.shape[0]) for im in imgs]
        widths = [int(im.shape[1]) for im in imgs]
        # TODO(synk): general ResizeShortestEdge bilinear resize not implemented;
        # inputs are constructed at the target size so get_transform is identity.
        #
        # Single host-side copy: np.stack over transposed (C, H, W) views.  This
        # is exactly where the PyTorch reference does its numpy
        # `.transpose(2, 0, 1)`; doing it here (instead of a device-side XLA
        # transpose pass before the pallas_call) keeps device HBM traffic at the
        # ideal ~5 B/px for this memory-bound preprocessing op.
        batch_chw = np.stack(
            [np.asarray(im, dtype=np.uint8).transpose(2, 0, 1) for im in imgs])
        images = batch_preprocess(jnp.asarray(batch_chw), self.input_format)
        # detectron2 returns self.model(inputs); here we return the exact
        # per-image dicts that would be fed to that model.
        return [{"image": images[i], "height": heights[i], "width": widths[i]}
                for i in range(images.shape[0])]


if __name__ == "__main__":
    key = jax.random.PRNGKey(0)
    B, H, W, C = 2, 16, 16, 3
    imgs_np = np.asarray(
        jax.random.randint(key, (B, H, W, C), 0, 256, dtype=jnp.int32),
        dtype=np.uint8)
    imgs = [imgs_np[i] for i in range(B)]

    predictor = BatchPredictorPallas(min_size_test=H, max_size_test=H,
                                     input_format="RGB")
    outputs = predictor(imgs)
    images = jnp.stack([o["image"] for o in outputs])
    jax.block_until_ready(images)

    # Reference: flip channels (RGB->BGR), cast float32, HWC -> CHW.
    ref = jnp.transpose(
        jnp.asarray(imgs_np)[..., ::-1].astype(jnp.float32), (0, 3, 1, 2))
    assert images.shape == (B, C, H, W) and images.dtype == jnp.float32
    assert jnp.allclose(images, ref), "mismatch vs reference preprocessing"
    assert outputs[0]["height"] == H and outputs[0]["width"] == W

    print("KERNEL_OK")
</pallas_src>

<mosaic_0001>
module attributes {stable_mosaic.version = 11 : i64} {
  func.func @kernel(%arg0: i32, %arg1: i32, %arg2: i32, %arg3: memref<1x1x8x16xi8, #tpu.memory_space<vmem>>, %arg4: memref<1x1x8x16xf32, #tpu.memory_space<vmem>>) attributes {dimension_semantics = [#tpu.dimension_semantics<parallel>, #tpu.dimension_semantics<parallel>, #tpu.dimension_semantics<parallel>], iteration_bounds = array<i64: 2, 3, 2>, scalar_prefetch = 0 : i64, scratch_operands = 0 : i64, tpu.core_type = #tpu.core_type<tc>, window_params = [{transform_indices = @transform_0, window_bounds = array<i64: 1, 1, 8, 16>}, {transform_indices = @transform_1, window_bounds = array<i64: 1, 1, 8, 16>}]} {
    %c0 = arith.constant 0 : index
    %c0_0 = arith.constant 0 : index
    %c0_1 = arith.constant 0 : index
    %c0_2 = arith.constant 0 : index
    %0 = vector.load %arg3[%c0, %c0_0, %c0_1, %c0_2] : memref<1x1x8x16xi8, #tpu.memory_space<vmem>>, vector<1x1x8x16xi8>
    %1 = arith.uitofp %0 : vector<1x1x8x16xi8> to vector<1x1x8x16xf32>
    %c0_3 = arith.constant 0 : index
    %c0_4 = arith.constant 0 : index
    %c0_5 = arith.constant 0 : index
    %c0_6 = arith.constant 0 : index
    %2 = vector.load %arg4[%c0_3, %c0_4, %c0_5, %c0_6] : memref<1x1x8x16xf32, #tpu.memory_space<vmem>>, vector<1x1x8x16xf32>
    tpu.vector_store %arg4[%c0_3, %c0_4, %c0_5, %c0_6], %1 {strides = array<i32>} : memref<1x1x8x16xf32, #tpu.memory_space<vmem>>, vector<1x1x8x16xf32>,
    return
  }
  func.func @transform_0(%arg0: i32, %arg1: i32, %arg2: i32) -> (i32, i32, i32, i32) {
    %c2_i32 = arith.constant 2 : i32
    %0 = arith.subi %c2_i32, %arg1 : i32
    %c0_i32 = arith.constant 0 : i32
    %c0_i32_0 = arith.constant 0 : i32
    return %arg0, %0, %arg2, %c0_i32 : i32, i32, i32, i32
  }
  func.func @transform_1(%arg0: i32, %arg1: i32, %arg2: i32) -> (i32, i32, i32, i32) {
    %c0_i32 = arith.constant 0 : i32
    %c0_i32_0 = arith.constant 0 : i32
    return %arg0, %arg1, %arg2, %c0_i32 : i32, i32, i32, i32
  }
}

</mosaic_0001>

<llo_original>
// kernel: tpu_custom_call.1
$region0: #{tpu_custom_call.1}
  #allocation0 [shape = 'u32[]', space=smem, size = 0x4, offset = 0x4, fixed_abs, tag = 'smem constant byte address 0x4 - core index']
  #allocation1 [shape = 'u32[144,128]{1,0:T(1,128)}', space=vmem, size = 0x12000, scoped, tag = 'internal scratch']
  %s0 = inlined_call_operand.hbm [shape: u8[2,3,16,16], index: 0, kind: input, shape index: {}]
  %s1 = inlined_call_operand.hbm [shape: f32[2,3,16,16], index: 1, kind: output, shape index: {}]
  %s2 = sld [smem:[#allocation0]]
  $region41: #{tpu_custom_call.1} parent=0
    _
  %s4 = ssub.s32 1, %s2
  %s5 = scalar_select 0, %s4, %s2
  $region1: #{tpu_custom_call.1} parent=0
    #allocation2 [shape = 'u8[2048]{0}', space=vmem, size = 0x800, scoped, tag = 'input window, operand 0']
    #allocation3 [shape = 's32[2]{0}', space=sflag, size = 0x8, scoped, tag = 'scoped memory for tpu_custom_call.1']
    #allocation4 [shape = 's32[2]{0}', space=sflag, size = 0x8, scoped, tag = 'scoped memory for tpu_custom_call.1']
    #allocation5 [shape = 'u8[8192]{0}', space=vmem, size = 0x2000, scoped, tag = 'output window, operand 0']
    %6 = vsyncpa [#allocation3], 0
    %s7 = scalar_lea.sflag [#allocation3], 1
    %8 = vsyncpa %s7, 0
    %9 = vsyncpa [#allocation4], 0
    %s10 = scalar_lea.sflag [#allocation4], 1
    %11 = vsyncpa %s10, 0
    loop: start=0, step=1, limit=14
    $region2: #{tpu_custom_call.1} parent=1 // loop_pre_header
      _
    $region3: #{tpu_custom_call.1} parent=1 // loop_header
      %s13 = sphi 0, %s17
      %p14 = scmp.ge.s32.totalorder %s13, 14
      %s20 = sphi 0, %s39
      %s21 = sphi 0, %s35
      %s22 = sphi 0, %s31
      %s23 = sphi 0, %s20
      %s24 = sphi 0, %s21
      %s25 = sphi 0, %s22
      %s26 = sphi 0, %s23
      %s27 = sphi 0, %s24
      %s28 = sphi 0, %s25
      %s48 = sphi 0, %s50
      %s51 = sphi 0, %s48
      %s52 = sphi 0, %s51
      %s68 = sphi 0, %s52
      %s78 = sphi 0, %s80
      %s81 = sphi 0, %s78
      %s82 = sphi 0, %s81
      %s98 = sphi 0, %s82
    $region4: #{tpu_custom_call.1} parent=1 // loop_header_branch
      %16 = sbr.rel (%p14) target = $region8
    $region5: #{tpu_custom_call.1} parent=1 // loop_body
      %s18 = ssub.s32 %s13, 1
      %s19 = ssub.s32 %s13, 2
      %s29 = sadd.s32 1, %s22
      %p30 = scmp.ge.s32.totalorder %s29, 2
      %s31 = scalar_select %p30, 0, %s29
      %s32 = sadd.s32 1, %s21
      %s33 = scalar_select %p30, %s32, %s21
      %p34 = scmp.ge.s32.totalorder %s33, 3
      %s35 = scalar_select %p34, 0, %s33
      %s36 = sadd.s32 1, %s20
      %s37 = scalar_select %p34, %s36, %s20
      %p38 = scmp.ge.s32.totalorder %s37, 2
      %s39 = scalar_select %p38, 0, %s37
      %s40 = ssub.s32 2, %s21
      %s41 = ssub.s32 2, %s35
      %s42 = ssub.s32 %s20, %s39
      %s43 = ssub.s32 %s40, %s41
      %s44 = sor.u32 %s42, %s43
      %s45 = ssub.s32 %s22, %s31
      %s46 = sor.u32 %s44, %s45
      %p47 = scmp.eq.s32.totalorder %s46, 0
      %s49 = sadd.s32 %s48, 1
      %s50 = scalar_select %p47, %s48, %s49
      %p53 = pneg %p47
      %p54 = scmp.eq.s32.totalorder %s13, 11
      %p55 = por %p53, %p54
      %p56 = scmp.ne.s32.totalorder %s48, %s51
      %p57 = scmp.eq.s32.totalorder %s13, 0
      %p58 = por %p56, %p57
      %p59 = scmp.ne.s32.totalorder %s48, %s51
      %p60 = scmp.eq.s32.totalorder %s18, 11
      %p61 = por %p59, %p60
      %p62 = scmp.ne.s32.totalorder %s51, %s52
      %p63 = scmp.eq.s32.totalorder %s18, 0
      %p64 = por %p62, %p63
      %p65 = scmp.ne.s32.totalorder %s51, %s52
      %p66 = scmp.eq.s32.totalorder %s19, 11
      %p67 = por %p65, %p66
      %p69 = scmp.ne.s32.totalorder %s52, %s68
      %p70 = scmp.eq.s32.totalorder %s19, 0
      %p71 = por %p69, %p70
      %s72 = ssub.s32 %s20, %s39
      %s73 = ssub.s32 %s21, %s35
      %s74 = sor.u32 %s72, %s73
      %s75 = ssub.s32 %s22, %s31
      %s76 = sor.u32 %s74, %s75
      %p77 = scmp.eq.s32.totalorder %s76, 0
      %s79 = sadd.s32 %s78, 1
      %s80 = scalar_select %p77, %s78, %s79
      %p83 = pneg %p77
      %p84 = scmp.eq.s32.totalorder %s13, 11
      %p85 = por %p83, %p84
      %p86 = scmp.ne.s32.totalorder %s78, %s81
      %p87 = scmp.eq.s32.totalorder %s13, 0
      %p88 = por %p86, %p87
      %p89 = scmp.ne.s32.totalorder %s78, %s81
      %p90 = scmp.eq.s32.totalorder %s18, 11
      %p91 = por %p89, %p90
      %p92 = scmp.ne.s32.totalorder %s81, %s82
      %p93 = scmp.eq.s32.totalorder %s18, 0
      %p94 = por %p92, %p93
      %p95 = scmp.ne.s32.totalorder %s81, %s82
      %p96 = scmp.eq.s32.totalorder %s19, 11
      %p97 = por %p95, %p96
      %p99 = scmp.ne.s32.totalorder %s82, %s98
      %p100 = scmp.eq.s32.totalorder %s19, 0
      %p101 = por %p99, %p100
      %p102 = scmp.le.s32.totalorder 1, %s13
      %p103 = scmp.lt.s32.totalorder %s13, 13
      %p104 = pnand %p102, %p103
      %p105 = pneg %p104
      // Predicated region
      $region9: #{tpu_custom_call.1} parent=5 // pred_check
        _
      $region10: #{tpu_custom_call.1} parent=5 // pred_check_branch
        %107 = sbr.rel (%p104) target = $region12
      $region11: #{tpu_custom_call.1} parent=5 // pred_region
        %s108 = ssub.s32 %s13, 1
      $region12: #{tpu_custom_call.1} parent=5 // pred_fallthru
        _
      %p109 = scmp.lt.s32.totalorder %s13, 12
      // Predicated region
      $region13: #{tpu_custom_call.1} parent=5 // pred_check
        %p110 = pneg %p109
      $region14: #{tpu_custom_call.1} parent=5 // pred_check_branch
        %112 = sbr.rel (%p110) target = $region16
      $region15: #{tpu_custom_call.1} parent=5 // pred_region
        // Predicated region
        $region17: #{tpu_custom_call.1} parent=15 // pred_check
          %p113 = pneg %p58
        $region18: #{tpu_custom_call.1} parent=15 // pred_check_branch
          %115 = sbr.rel (%p113) target = $region20
        $region19: #{tpu_custom_call.1} parent=15 // pred_region
          %s116 = sand.u32 %s48, 1
          %s117 = scalar_lea.sflag [#allocation3], %s116
          %s118 = sand.u32 %s48, 1
          %s119 = smul.addr %s118, 2
          %s120 = scalar_lea.vmem [#allocation2], %s119
          %s121 = ssub.s32 2, %s21
          %s123 = ssub.s32 32, 32
          %124 = vsyncadd %s117, %s123
          %s125 = smul.addr %s121, 2
          %s126 = sadd.s32 %s22, %s125
          %s127 = smul.addr %s20, 6
          %s128 = sadd.s32 %s126, %s127
          %s129 = smul.addr %s128, 32
          %s130 = scalar_lea.hbm %s0, %s129
          %s132 = sshll.u32 %s120, 4
          %s133 = int_to_ptr.vmem [resolvable:$true] %s132
          %135 = dma.hbm_to_vmem [thread:$0]  %s130, 32, %s133, %s117
        $region20: #{tpu_custom_call.1} parent=15 // pred_fallthru
          _
      $region16: #{tpu_custom_call.1} parent=5 // pred_fallthru
        _
      %p136 = scmp.le.s32.totalorder 1, %s13
      %p137 = scmp.lt.s32.totalorder %s13, 13
      %p138 = pnand %p136, %p137
      %p139 = pneg %p138
      // Predicated region
      $region21: #{tpu_custom_call.1} parent=5 // pred_check
        _
      $region22: #{tpu_custom_call.1} parent=5 // pred_check_branch
        %141 = sbr.rel (%p138) target = $region24
      $region23: #{tpu_custom_call.1} parent=5 // pred_region
        %s142 = ssub.s32 %s13, 1
        %s143 = sand.u32 %s51, 1
        %s144 = scalar_lea.sflag [#allocation3], %s143
        %s145 = sand.u32 %s51, 1
        %s146 = smul.addr %s145, 2
        %s147 = scalar_lea.vmem [#allocation2], %s146
        // Predicated region
        $region25: #{tpu_custom_call.1} parent=23 // pred_check
          %p148 = pneg %p64
        $region26: #{tpu_custom_call.1} parent=23 // pred_check_branch
          %150 = sbr.rel (%p148) target = $region28
        $region27: #{tpu_custom_call.1} parent=23 // pred_region
          %151 = dma.done %s144, 32
        $region28: #{tpu_custom_call.1} parent=23 // pred_fallthru
          _
        %s152 = sand.u32 %s51, 1
        %s153 = scalar_lea.sflag [#allocation3], %s152
        %s154 = sand.u32 %s51, 1
        %s155 = smul.addr %s154, 2
        %s156 = scalar_lea.vmem [#allocation2], %s155
        %p157 = pneg %p64
        %p158 = pneg %p61
        %p159 = pneg %p94
        %p160 = pneg %p91
        %s161 = sand.u32 %s81, 1
        %s162 = scalar_lea.sflag [#allocation4], %s161
        %s163 = sand.u32 %s81, 1
        %s164 = smul.addr %s163, 8
        %s165 = scalar_lea.vmem [#allocation5], %s164
        %s166 = ssub.s32 2, %s24
        %v167 = vld [vmem:[%s147] sm:$0x3]
        %v168 = vunpack.c.0.s8 %v167
        %v169 = vand.u32 %v168, 255
        %v170 = vcvt.s32.f32 %v169
        %vm171 = vcmask 130048
        %172 = vst.msk [vmem:[%s165] sm:$0xff] %vm171, %v170
        %s173 = sand.u32 %s81, 1
        %s174 = scalar_lea.sflag [#allocation4], %s173
        %s175 = sand.u32 %s81, 1
        %s176 = smul.addr %s175, 8
        %s177 = scalar_lea.vmem [#allocation5], %s176
        // Predicated region
        $region29: #{tpu_custom_call.1} parent=23 // pred_check
          %p178 = pneg %p91
        $region30: #{tpu_custom_call.1} parent=23 // pred_check_branch
          %180 = sbr.rel (%p178) target = $region32
        $region31: #{tpu_custom_call.1} parent=23 // pred_region
          %s182 = ssub.s32 128, 128
          %183 = vsyncadd %s174, %s182
          %s184 = smul.addr %s24, 2
          %s185 = sadd.s32 %s25, %s184
          %s186 = smul.addr %s23, 6
          %s187 = sadd.s32 %s185, %s186
          %s188 = smul.addr %s187, 128
          %s189 = scalar_lea.hbm %s1, %s188
          %s191 = sshll.u32 %s177, 4
          %s192 = int_to_ptr.vmem [resolvable:$true] %s191
          %194 = dma.vmem_to_hbm [thread:$0]  %s192, 128, %s189, %s174
        $region32: #{tpu_custom_call.1} parent=23 // pred_fallthru
          _
      $region24: #{tpu_custom_call.1} parent=5 // pred_fallthru
        _
      %p195 = scmp.le.s32.totalorder 2, %s13
      // Predicated region
      $region33: #{tpu_custom_call.1} parent=5 // pred_check
        %p196 = pneg %p195
      $region34: #{tpu_custom_call.1} parent=5 // pred_check_branch
        %198 = sbr.rel (%p196) target = $region36
      $region35: #{tpu_custom_call.1} parent=5 // pred_region
        %s199 = ssub.s32 %s13, 2
        // Predicated region
        $region37: #{tpu_custom_call.1} parent=35 // pred_check
          %p200 = pneg %p97
        $region38: #{tpu_custom_call.1} parent=35 // pred_check_branch
          %202 = sbr.rel (%p200) target = $region40
        $region39: #{tpu_custom_call.1} parent=35 // pred_region
          %s203 = sand.u32 %s82, 1
          %s204 = scalar_lea.sflag [#allocation4], %s203
          %s205 = sand.u32 %s82, 1
          %s206 = smul.addr %s205, 8
          %s207 = scalar_lea.vmem [#allocation5], %s206
          %208 = dma.done %s204, 128
        $region40: #{tpu_custom_call.1} parent=35 // pred_fallthru
          _
      $region36: #{tpu_custom_call.1} parent=5 // pred_fallthru
        _
    $region6: #{tpu_custom_call.1} parent=1 // loop_footer
      %s17 = sadd.s32 1, %s13
    $region7: #{tpu_custom_call.1} parent=1 // loop_footer_branch
      %12 = sbr.rel target = $region3
    $region8: #{tpu_custom_call.1} parent=1 // loop_exit
      _
    %209 = vsyncpa [#allocation3], 1
    %s210 = scalar_lea.sflag [#allocation3], 1
    %211 = vsyncpa %s210, 1
    %212 = vsyncpa [#allocation4], 1
    %s213 = scalar_lea.sflag [#allocation4], 1
    %214 = vsyncpa %s213, 1

</llo_original>
